<compile_context>
chip_gen: v7x
topology: tpu7x:2x2x1
jax: 0.10.0
libtpu: 0.0.40
codegen_flags: <defaults>
</compile_context>

<pallas_src>
import math

import jax
import jax.numpy as jnp
from jax.experimental import pallas as pl
from jax.experimental.pallas import tpu as pltpu


# ---------------------------------------------------------------------------
# PE buffer construction (parameter setup, plain JAX)
# ---------------------------------------------------------------------------
def make_positional_encoding(num_cycles, num_points, embed_dim, dtype=jnp.float32):
    """Sinusoidal PE buffer, shape (1, num_cycles, num_points, embed_dim).

    Build it in the activation dtype so the forward pass never pays a per-call
    dtype convert on the pe stream.
    """
    seq = num_cycles * num_points
    position = jnp.arange(seq, dtype=jnp.float32)[:, None]                      # (S, 1)
    div_term = jnp.exp(
        jnp.arange(0, embed_dim, 2, dtype=jnp.float32) * (-math.log(10000.0) / embed_dim)
    )                                                                           # (ceil(E/2),)
    pe = jnp.zeros((seq, embed_dim), dtype=jnp.float32)
    pe = pe.at[:, 0::2].set(jnp.sin(position * div_term))                       # ceil(E/2) cols
    pe = pe.at[:, 1::2].set(jnp.cos(position * div_term)[:, : embed_dim // 2])  # floor(E/2) cols
    return pe.reshape(1, num_cycles, num_points, embed_dim).astype(dtype)


# ---------------------------------------------------------------------------
# Kernel: elementwise add of one x tile and its matching pe tile.
# ---------------------------------------------------------------------------
def _add_kernel(x_ref, pe_ref, o_ref):
    o_ref[...] = x_ref[...] + pe_ref[...]


# ---------------------------------------------------------------------------
# Wrapper-side tiling helpers (pure Python, run at trace time)
# ---------------------------------------------------------------------------
_MAX_LANE_W = 4096          # cap on flattened lane width (elements)


def _select_tile_config():
    """Pick (tile_bytes, vmem_limit_bytes) from the TPU generation.

    Conservative fallback if detection fails: 2 MiB tiles, no explicit limit
    (safe under every generation's scoped-VMEM default: 6 x 2 MiB = 12 MiB).
    """
    tile_bytes = 2 << 20
    vmem_limit = None
    try:
        kind = jax.devices()[0].device_kind.lower()
    except Exception:  # pragma: no cover - detection is best-effort
        return tile_bytes, vmem_limit
    if "v5" in kind:
        # v5e: 16 MiB scoped default, ~820 GB/s HBM -> 2 MiB tiles already
        # amortize the per-step overhead to ~10-15%; stay under the default.
        tile_bytes = 2 << 20
        vmem_limit = None
    elif "v6" in kind:
        # v6e: 128 MiB physical VMEM; 4 MiB tiles x ~6 buffers = 24 MiB, raise
        # the scoped limit for compiler-scratch headroom.
        tile_bytes = 4 << 20
        vmem_limit = 48 << 20
    elif "7" in kind:
        # v7x: 64 MiB physical / 32 MiB scoped default; prefer the larger tile
        # and raise the limit so the compiler never silently shrinks blocks.
        tile_bytes = 4 << 20
        vmem_limit = 48 << 20
    return tile_bytes, vmem_limit


def _largest_mult128_divisor(n, cap):
    """Largest d with d % 128 == 0, d | n, d <= cap. Assumes n % 128 == 0."""
    m = n // 128
    g = max(1, min(m, cap // 128))
    for k in range(g, 0, -1):
        if m % k == 0:
            return k * 128
    return 128


def _choose_row_tile(nrows, W, itemsize, tile_bytes):
    """Rows per tile: full extent if it fits the budget, else a multiple of 8.

    Partial trailing blocks are handled by the caller via pl.cdiv, so the tile
    does not have to divide nrows.
    """
    row_cap = max(1, tile_bytes // max(1, W * itemsize))
    if nrows <= row_cap:
        return nrows                      # full row extent (legal: equals array dim)
    if row_cap < 8:
        return min(8, nrows)              # smallest legal 8-aligned sub-block
    return row_cap - (row_cap % 8)        # largest 8-aligned tile under budget


# ---------------------------------------------------------------------------
# Forward
# ---------------------------------------------------------------------------
def positional_encoding_forward(x, pe, *, tile_bytes=None, donate_x=False):
    """x: (B, C, P, E), pe: (1, C, P, E) -> x + pe (broadcast over batch)."""
    B, C, P, E = x.shape
    assert pe.shape == (1, C, P, E)
    if pe.dtype != x.dtype:
        # Compatibility fallback only; prefer building pe in x.dtype once
        # (make_positional_encoding(..., dtype=x.dtype)) so this un-fused
        # HBM-roundtrip convert never runs per call.
        pe = pe.astype(x.dtype)

    detected_tile_bytes, vmem_limit = _select_tile_config()
    if tile_bytes is None:
        tile_bytes = detected_tile_bytes

    itemsize = x.dtype.itemsize
    L = C * P * E                      # flattened per-batch slab length

    # Lane-dense layout when possible: last dim a multiple of 128 -> unmasked
    # vst.  Otherwise fall back to (B, C*P, E); correctness is unaffected.
    if L % 128 == 0:
        W = _largest_mult128_divisor(L, cap=_MAX_LANE_W)
        nrows = L // W
    else:
        # TODO(synk): E < 128 here emits masked stores; rare (odd embed dims).
        W = E
        nrows = C * P

    TR = _choose_row_tile(nrows, W, itemsize, tile_bytes)
    n_rtiles = pl.cdiv(nrows, TR)

    # v7x megacore balance: if the whole row extent collapsed into one tile and
    # the batch axis alone cannot split evenly across 2 TensorCores, halve the
    # row tile.  Negligible cost on 1-TC chips (one extra grid step).
    if n_rtiles == 1 and nrows >= 16 and B in (1, 3):
        TR = max(8, ((nrows // 2) // 8) * 8)
        n_rtiles = pl.cdiv(nrows, TR)

    x3 = x.reshape(B, nrows, W)
    pe3 = pe.reshape(1, nrows, W)
    blk = (1, TR, W)

    # Grid: row-tile axis OUTER, batch INNER -> the pe block index is constant
    # across the inner batch loop, so each pe tile is DMA'd from HBM only once.
    grid_spec = pltpu.PrefetchScalarGridSpec(
        num_scalar_prefetch=0,
        grid=(n_rtiles, B),
        in_specs=[
            pl.BlockSpec(blk, lambda r, b: (b, r, 0)),   # x
            pl.BlockSpec(blk, lambda r, b: (0, r, 0)),   # pe (VMEM-resident over batch)
        ],
        out_specs=pl.BlockSpec(blk, lambda r, b: (b, r, 0)),
    )
    out3 = pl.pallas_call(
        _add_kernel,
        out_shape=jax.ShapeDtypeStruct((B, nrows, W), x.dtype),
        grid_spec=grid_spec,
        compiler_params=pltpu.CompilerParams(
            dimension_semantics=("parallel", "parallel"),
            vmem_limit_bytes=vmem_limit,
        ),
        input_output_aliases=({0: 0} if donate_x else {}),
    )(x3, pe3)
    return out3.reshape(B, C, P, E)


if __name__ == "__main__":
    key = jax.random.PRNGKey(0)

    # --- 1) Main demo shapes (lane-dense path) -----------------------------
    B, C, P, E = 2, 4, 8, 32
    k1, k2, k3 = jax.random.split(key, 3)
    x = jax.random.normal(k1, (B, C, P, E), dtype=jnp.float32)
    pe = make_positional_encoding(C, P, E, dtype=x.dtype)
    out = jax.block_until_ready(positional_encoding_forward(x, pe))
    assert out.shape == x.shape
    assert jnp.allclose(out, x + pe, atol=1e-6), "mismatch (main path)"

    # --- 2) Fallback path (L % 128 != 0) with a partial trailing row block --
    Bf, Cf, Pf, Ef = 2, 3, 5, 32            # L = 480
    xf = jax.random.normal(k2, (Bf, Cf, Pf, Ef), dtype=jnp.float32)
    pef = make_positional_encoding(Cf, Pf, Ef, dtype=xf.dtype)
    outf = jax.block_until_ready(
        positional_encoding_forward(xf, pef, tile_bytes=1024))  # force TR=8, 2 tiles
    assert jnp.allclose(outf, xf + pef, atol=1e-6), "mismatch (fallback path)"

    # --- 3) Lane-dense path with a partial trailing row block ---------------
    Bd, Cd, Pd, Ed = 2, 8, 36, 128          # L = 36864 -> W = 4096, nrows = 9
    xd = jax.random.normal(k3, (Bd, Cd, Pd, Ed), dtype=jnp.float32)
    ped = make_positional_encoding(Cd, Pd, Ed, dtype=xd.dtype)
    outd = jax.block_until_ready(
        positional_encoding_forward(xd, ped, tile_bytes=8 * 4096 * 4))  # TR=8, 2 tiles
    assert jnp.allclose(outd, xd + ped, atol=1e-6), "mismatch (partial lane-dense)"

    print("KERNEL_OK")
</pallas_src>

<mosaic_0001>
module attributes {stable_mosaic.version = 11 : i64} {
  func.func @_add_kernel(%arg0: i32, %arg1: i32, %arg2: memref<1x1x1024xf32, #tpu.memory_space<vmem>>, %arg3: memref<1x1x1024xf32, #tpu.memory_space<vmem>>, %arg4: memref<1x1x1024xf32, #tpu.memory_space<vmem>>) attributes {dimension_semantics = [#tpu.dimension_semantics<parallel>, #tpu.dimension_semantics<parallel>], iteration_bounds = array<i64: 1, 2>, scalar_prefetch = 0 : i64, scratch_operands = 0 : i64, tpu.core_type = #tpu.core_type<tc>, window_params = [{transform_indices = @transform_0, window_bounds = array<i64: 1, 1, 1024>}, {transform_indices = @transform_1, window_bounds = array<i64: 1, 1, 1024>}, {transform_indices = @transform_2, window_bounds = array<i64: 1, 1, 1024>}]} {
    %c0 = arith.constant 0 : index
    %c0_0 = arith.constant 0 : index
    %c0_1 = arith.constant 0 : index
    %0 = vector.load %arg2[%c0, %c0_0, %c0_1] : memref<1x1x1024xf32, #tpu.memory_space<vmem>>, vector<1x1x1024xf32>
    %c0_2 = arith.constant 0 : index
    %c0_3 = arith.constant 0 : index
    %c0_4 = arith.constant 0 : index
    %1 = vector.load %arg3[%c0_2, %c0_3, %c0_4] : memref<1x1x1024xf32, #tpu.memory_space<vmem>>, vector<1x1x1024xf32>
    %2 = arith.addf %0, %1 : vector<1x1x1024xf32>
    %c0_5 = arith.constant 0 : index
    %c0_6 = arith.constant 0 : index
    %c0_7 = arith.constant 0 : index
    %3 = vector.load %arg4[%c0_5, %c0_6, %c0_7] : memref<1x1x1024xf32, #tpu.memory_space<vmem>>, vector<1x1x1024xf32>
    tpu.vector_store %arg4[%c0_5, %c0_6, %c0_7], %2 {strides = array<i32>} : memref<1x1x1024xf32, #tpu.memory_space<vmem>>, vector<1x1x1024xf32>,
    return
  }
  func.func @transform_0(%arg0: i32, %arg1: i32) -> (i32, i32, i32) {
    %c0_i32 = arith.constant 0 : i32
    %c0_i32_0 = arith.constant 0 : i32
    return %arg1, %arg0, %c0_i32 : i32, i32, i32
  }
  func.func @transform_1(%arg0: i32, %arg1: i32) -> (i32, i32, i32) {
    %c0_i32 = arith.constant 0 : i32
    %c0_i32_0 = arith.constant 0 : i32
    %c0_i32_1 = arith.constant 0 : i32
    return %c0_i32, %arg0, %c0_i32_0 : i32, i32, i32
  }
  func.func @transform_2(%arg0: i32, %arg1: i32) -> (i32, i32, i32) {
    %c0_i32 = arith.constant 0 : i32
    %c0_i32_0 = arith.constant 0 : i32
    return %arg1, %arg0, %c0_i32 : i32, i32, i32
  }
}

</mosaic_0001>

<llo_original>
// kernel: tpu_custom_call.1
$region0: #{tpu_custom_call.1}
  #allocation0 [shape = 'u32[]', space=smem, size = 0x4, offset = 0x4, fixed_abs, tag = 'smem constant byte address 0x4 - core index']
  #allocation1 [shape = 'u32[144,128]{1,0:T(1,128)}', space=vmem, size = 0x12000, scoped, tag = 'internal scratch']
  %s0 = inlined_call_operand.hbm [shape: f32[2,1,1024], index: 0, kind: input, shape index: {}]
  %s1 = inlined_call_operand.hbm [shape: f32[1,1,1024], index: 1, kind: input, shape index: {}]
  %s2 = inlined_call_operand.hbm [shape: f32[2,1,1024], index: 2, kind: output, shape index: {}]
  %s3 = sld [smem:[#allocation0]]
  $region49: #{tpu_custom_call.1} parent=0
    _
  %s5 = ssub.s32 1, %s3
  %s6 = scalar_select 0, %s5, %s3
  $region1: #{tpu_custom_call.1} parent=0
    #allocation2 [shape = 'u8[8192]{0}', space=vmem, size = 0x2000, scoped, tag = 'input window, operand 0']
    #allocation3 [shape = 's32[2]{0}', space=sflag, size = 0x8, scoped, tag = 'scoped memory for tpu_custom_call.1']
    #allocation4 [shape = 's32[2]{0}', space=sflag, size = 0x8, scoped, tag = 'scoped memory for tpu_custom_call.1']
    #allocation5 [shape = 'u8[4096]{0}', space=vmem, size = 0x1000, scoped, tag = 'input window, operand 1, single buffered']
    #allocation6 [shape = 's32[1]{0}', space=sflag, size = 0x4, scoped, tag = 'scoped memory for tpu_custom_call.1']
    #allocation7 [shape = 'u8[8192]{0}', space=vmem, size = 0x2000, scoped, tag = 'output window, operand 0']
    %7 = vsyncpa [#allocation3], 0
    %s8 = scalar_lea.sflag [#allocation3], 1
    %9 = vsyncpa %s8, 0
    %10 = vsyncpa [#allocation6], 0
    %11 = vsyncpa [#allocation4], 0
    %s12 = scalar_lea.sflag [#allocation4], 1
    %13 = vsyncpa %s12, 0
    loop: start=0, step=1, limit=4
    $region2: #{tpu_custom_call.1} parent=1 // loop_pre_header
      _
    $region3: #{tpu_custom_call.1} parent=1 // loop_header
      %s15 = sphi 0, %s19
      %p16 = scmp.ge.s32.totalorder %s15, 4
      %s22 = sphi 0, %s34
      %s23 = sphi 0, %s30
      %s24 = sphi 0, %s22
      %s25 = sphi 0, %s23
      %s26 = sphi 0, %s24
      %s27 = sphi 0, %s25
      %s39 = sphi 0, %s41
      %s42 = sphi 0, %s39
      %s43 = sphi 0, %s42
      %s59 = sphi 0, %s43
      %s65 = sphi 0, %s67
      %s68 = sphi 0, %s65
      %s69 = sphi 0, %s68
      %s85 = sphi 0, %s69
      %s93 = sphi 0, %s95
      %s96 = sphi 0, %s93
      %s97 = sphi 0, %s96
      %s113 = sphi 0, %s97
    $region4: #{tpu_custom_call.1} parent=1 // loop_header_branch
      %18 = sbr.rel (%p16) target = $region8
    $region5: #{tpu_custom_call.1} parent=1 // loop_body
      %s20 = ssub.s32 %s15, 1
      %s21 = ssub.s32 %s15, 2
      %s28 = sadd.s32 1, %s23
      %p29 = scmp.ge.s32.totalorder %s28, 2
      %s30 = scalar_select %p29, 0, %s28
      %s31 = sadd.s32 1, %s22
      %s32 = scalar_select %p29, %s31, %s22
      %p33 = scmp.ge.s32.totalorder %s32, 1
      %s34 = scalar_select %p33, 0, %s32
      %s35 = ssub.s32 %s23, %s30
      %s36 = ssub.s32 %s22, %s34
      %s37 = sor.u32 %s35, %s36
      %p38 = scmp.eq.s32.totalorder %s37, 0
      %s40 = sadd.s32 %s39, 1
      %s41 = scalar_select %p38, %s39, %s40
      %p44 = pneg %p38
      %p45 = scmp.eq.s32.totalorder %s15, 1
      %p46 = por %p44, %p45
      %p47 = scmp.ne.s32.totalorder %s39, %s42
      %p48 = scmp.eq.s32.totalorder %s15, 0
      %p49 = por %p47, %p48
      %p50 = scmp.ne.s32.totalorder %s39, %s42
      %p51 = scmp.eq.s32.totalorder %s20, 1
      %p52 = por %p50, %p51
      %p53 = scmp.ne.s32.totalorder %s42, %s43
      %p54 = scmp.eq.s32.totalorder %s20, 0
      %p55 = por %p53, %p54
      %p56 = scmp.ne.s32.totalorder %s42, %s43
      %p57 = scmp.eq.s32.totalorder %s21, 1
      %p58 = por %p56, %p57
      %p60 = scmp.ne.s32.totalorder %s43, %s59
      %p61 = scmp.eq.s32.totalorder %s21, 0
      %p62 = por %p60, %p61
      %s63 = ssub.s32 %s22, %s34
      %p64 = scmp.eq.s32.totalorder %s63, 0
      %s66 = sadd.s32 %s65, 1
      %s67 = scalar_select %p64, %s65, %s66
      %p70 = pneg %p64
      %p71 = scmp.eq.s32.totalorder %s15, 1
      %p72 = por %p70, %p71
      %p73 = scmp.ne.s32.totalorder %s65, %s68
      %p74 = scmp.eq.s32.totalorder %s15, 0
      %p75 = por %p73, %p74
      %p76 = scmp.ne.s32.totalorder %s65, %s68
      %p77 = scmp.eq.s32.totalorder %s20, 1
      %p78 = por %p76, %p77
      %p79 = scmp.ne.s32.totalorder %s68, %s69
      %p80 = scmp.eq.s32.totalorder %s20, 0
      %p81 = por %p79, %p80
      %p82 = scmp.ne.s32.totalorder %s68, %s69
      %p83 = scmp.eq.s32.totalorder %s21, 1
      %p84 = por %p82, %p83
      %p86 = scmp.ne.s32.totalorder %s69, %s85
      %p87 = scmp.eq.s32.totalorder %s21, 0
      %p88 = por %p86, %p87
      %s89 = ssub.s32 %s23, %s30
      %s90 = ssub.s32 %s22, %s34
      %s91 = sor.u32 %s89, %s90
      %p92 = scmp.eq.s32.totalorder %s91, 0
      %s94 = sadd.s32 %s93, 1
      %s95 = scalar_select %p92, %s93, %s94
      %p98 = pneg %p92
      %p99 = scmp.eq.s32.totalorder %s15, 1
      %p100 = por %p98, %p99
      %p101 = scmp.ne.s32.totalorder %s93, %s96
      %p102 = scmp.eq.s32.totalorder %s15, 0
      %p103 = por %p101, %p102
      %p104 = scmp.ne.s32.totalorder %s93, %s96
      %p105 = scmp.eq.s32.totalorder %s20, 1
      %p106 = por %p104, %p105
      %p107 = scmp.ne.s32.totalorder %s96, %s97
      %p108 = scmp.eq.s32.totalorder %s20, 0
      %p109 = por %p107, %p108
      %p110 = scmp.ne.s32.totalorder %s96, %s97
      %p111 = scmp.eq.s32.totalorder %s21, 1
      %p112 = por %p110, %p111
      %p114 = scmp.ne.s32.totalorder %s97, %s113
      %p115 = scmp.eq.s32.totalorder %s21, 0
      %p116 = por %p114, %p115
      %p117 = scmp.le.s32.totalorder 1, %s15
      %p118 = scmp.lt.s32.totalorder %s15, 3
      %p119 = pnand %p117, %p118
      %p120 = pneg %p119
      // Predicated region
      $region9: #{tpu_custom_call.1} parent=5 // pred_check
        _
      $region10: #{tpu_custom_call.1} parent=5 // pred_check_branch
        %122 = sbr.rel (%p119) target = $region12
      $region11: #{tpu_custom_call.1} parent=5 // pred_region
        %s123 = ssub.s32 %s15, 1
        // Predicated region
        $region13: #{tpu_custom_call.1} parent=11 // pred_check
          %p124 = pneg %p81
        $region14: #{tpu_custom_call.1} parent=11 // pred_check_branch
          %126 = sbr.rel (%p124) target = $region16
        $region15: #{tpu_custom_call.1} parent=11 // pred_region
          %s128 = ssub.s32 128, 128
          %129 = vsyncadd [#allocation6], %s128
          %s130 = smul.addr %s24, 8
          %s131 = smul.addr %s130, 16
          %s132 = scalar_lea.hbm %s1, %s131
          %s134 = sshll.u32 [#allocation5], 4
          %s135 = int_to_ptr.vmem [resolvable:$true] %s134
          %137 = dma.hbm_to_vmem [thread:$0]  %s132, 128, %s135, [#allocation6]
        $region16: #{tpu_custom_call.1} parent=11 // pred_fallthru
          _
      $region12: #{tpu_custom_call.1} parent=5 // pred_fallthru
        _
      %p138 = scmp.lt.s32.totalorder %s15, 2
      // Predicated region
      $region17: #{tpu_custom_call.1} parent=5 // pred_check
        %p139 = pneg %p138
      $region18: #{tpu_custom_call.1} parent=5 // pred_check_branch
        %141 = sbr.rel (%p139) target = $region20
      $region19: #{tpu_custom_call.1} parent=5 // pred_region
        // Predicated region
        $region21: #{tpu_custom_call.1} parent=19 // pred_check
          %p142 = pneg %p49
        $region22: #{tpu_custom_call.1} parent=19 // pred_check_branch
          %144 = sbr.rel (%p142) target = $region24
        $region23: #{tpu_custom_call.1} parent=19 // pred_region
          %s145 = sand.u32 %s39, 1
          %s146 = scalar_lea.sflag [#allocation3], %s145
          %s147 = sand.u32 %s39, 1
          %s148 = smul.addr %s147, 8
          %s149 = scalar_lea.vmem [#allocation2], %s148
          %s151 = ssub.s32 128, 128
          %152 = vsyncadd %s146, %s151
          %s153 = smul.addr %s22, 8
          %s154 = smul.addr %s23, 8
          %s155 = sadd.s32 %s153, %s154
          %s156 = smul.addr %s155, 16
          %s157 = scalar_lea.hbm %s0, %s156
          %s159 = sshll.u32 %s149, 4
          %s160 = int_to_ptr.vmem [resolvable:$true] %s159
          %162 = dma.hbm_to_vmem [thread:$0]  %s157, 128, %s160, %s146
        $region24: #{tpu_custom_call.1} parent=19 // pred_fallthru
          _
      $region20: #{tpu_custom_call.1} parent=5 // pred_fallthru
        _
      %p163 = scmp.le.s32.totalorder 1, %s15
      %p164 = scmp.lt.s32.totalorder %s15, 3
      %p165 = pnand %p163, %p164
      %p166 = pneg %p165
      // Predicated region
      $region25: #{tpu_custom_call.1} parent=5 // pred_check
        _
      $region26: #{tpu_custom_call.1} parent=5 // pred_check_branch
        %168 = sbr.rel (%p165) target = $region28
      $region27: #{tpu_custom_call.1} parent=5 // pred_region
        %s169 = ssub.s32 %s15, 1
        %s170 = sand.u32 %s42, 1
        %s171 = scalar_lea.sflag [#allocation3], %s170
        %s172 = sand.u32 %s42, 1
        %s173 = smul.addr %s172, 8
        %s174 = scalar_lea.vmem [#allocation2], %s173
        // Predicated region
        $region29: #{tpu_custom_call.1} parent=27 // pred_check
          %p175 = pneg %p55
        $region30: #{tpu_custom_call.1} parent=27 // pred_check_branch
          %177 = sbr.rel (%p175) target = $region32
        $region31: #{tpu_custom_call.1} parent=27 // pred_region
          %178 = dma.done %s171, 128
        $region32: #{tpu_custom_call.1} parent=27 // pred_fallthru
          _
        // Predicated region
        $region33: #{tpu_custom_call.1} parent=27 // pred_check
          %p179 = pneg %p81
        $region34: #{tpu_custom_call.1} parent=27 // pred_check_branch
          %181 = sbr.rel (%p179) target = $region36
        $region35: #{tpu_custom_call.1} parent=27 // pred_region
          %182 = dma.done [#allocation6], 128
        $region36: #{tpu_custom_call.1} parent=27 // pred_fallthru
          _
        %s183 = sand.u32 %s42, 1
        %s184 = scalar_lea.sflag [#allocation3], %s183
        %s185 = sand.u32 %s42, 1
        %s186 = smul.addr %s185, 8
        %s187 = scalar_lea.vmem [#allocation2], %s186
        %p188 = pneg %p55
        %p189 = pneg %p52
        %p190 = pneg %p81
        %p191 = pneg %p78
        %p192 = pneg %p109
        %p193 = pneg %p106
        %s194 = sand.u32 %s96, 1
        %s195 = scalar_lea.sflag [#allocation4], %s194
        %s196 = sand.u32 %s96, 1
        %s197 = smul.addr %s196, 8
        %s198 = scalar_lea.vmem [#allocation7], %s197
        %v199 = vld [vmem:[%s174] sm:$0xff]
        %v200 = vld [vmem:[#allocation5] sm:$0xff]
        %v201 = vadd.f32 %v199, %v200
        %202 = vst [vmem:[%s198] sm:$0xff] %v201
        %s203 = sand.u32 %s96, 1
        %s204 = scalar_lea.sflag [#allocation4], %s203
        %s205 = sand.u32 %s96, 1
        %s206 = smul.addr %s205, 8
        %s207 = scalar_lea.vmem [#allocation7], %s206
        // Predicated region
        $region37: #{tpu_custom_call.1} parent=27 // pred_check
          %p208 = pneg %p106
        $region38: #{tpu_custom_call.1} parent=27 // pred_check_branch
          %210 = sbr.rel (%p208) target = $region40
        $region39: #{tpu_custom_call.1} parent=27 // pred_region
          %s212 = ssub.s32 128, 128
          %213 = vsyncadd %s204, %s212
          %s214 = smul.addr %s24, 8
          %s215 = smul.addr %s25, 8
          %s216 = sadd.s32 %s214, %s215
          %s217 = smul.addr %s216, 16
          %s218 = scalar_lea.hbm %s2, %s217
          %s220 = sshll.u32 %s207, 4
          %s221 = int_to_ptr.vmem [resolvable:$true] %s220
          %223 = dma.vmem_to_hbm [thread:$0]  %s221, 128, %s218, %s204
        $region40: #{tpu_custom_call.1} parent=27 // pred_fallthru
          _
      $region28: #{tpu_custom_call.1} parent=5 // pred_fallthru
        _
      %p224 = scmp.le.s32.totalorder 2, %s15
      // Predicated region
      $region41: #{tpu_custom_call.1} parent=5 // pred_check
        %p225 = pneg %p224
      $region42: #{tpu_custom_call.1} parent=5 // pred_check_branch
        %227 = sbr.rel (%p225) target = $region44
      $region43: #{tpu_custom_call.1} parent=5 // pred_region
        %s228 = ssub.s32 %s15, 2
        // Predicated region
        $region45: #{tpu_custom_call.1} parent=43 // pred_check
          %p229 = pneg %p112
        $region46: #{tpu_custom_call.1} parent=43 // pred_check_branch
          %231 = sbr.rel (%p229) target = $region48
        $region47: #{tpu_custom_call.1} parent=43 // pred_region
          %s232 = sand.u32 %s97, 1
          %s233 = scalar_lea.sflag [#allocation4], %s232
          %s234 = sand.u32 %s97, 1
          %s235 = smul.addr %s234, 8
          %s236 = scalar_lea.vmem [#allocation7], %s235
          %237 = dma.done %s233, 128
        $region48: #{tpu_custom_call.1} parent=43 // pred_fallthru
          _
      $region44: #{tpu_custom_call.1} parent=5 // pred_fallthru
        _
    $region6: #{tpu_custom_call.1} parent=1 // loop_footer
      %s19 = sadd.s32 1, %s15
    $region7: #{tpu_custom_call.1} parent=1 // loop_footer_branch
      %14 = sbr.rel target = $region3
    $region8: #{tpu_custom_call.1} parent=1 // loop_exit
      _
    %238 = vsyncpa [#allocation3], 1
    %s239 = scalar_lea.sflag [#allocation3], 1
    %240 = vsyncpa %s239, 1
    %241 = vsyncpa [#allocation6], 1
    %242 = vsyncpa [#allocation4], 1
    %s243 = scalar_lea.sflag [#allocation4], 1
    %244 = vsyncpa %s243, 1

</llo_original>
